<compile_context>
chip_gen: v6e
topology: v6e:2x2x1
jax: 0.10.0
libtpu: 0.0.40
codegen_flags: <defaults>
</compile_context>

<pallas_src>
import jax
import jax.numpy as jnp
from jax.experimental import pallas as pl
from jax.experimental.pallas import tpu as pltpu

BN_EPS = 1e-5


def _round_up(a, m):
    return (a + m - 1) // m * m


# ---------------------------------------------------------------------------
# Kernel 1: per-feature batch sums (sum, sum-of-squares) for the BN statistics.
# Grid is tiled over the batch; the four outputs are grid-resident accumulators
# (same block index every step), initialized on the first step with pl.when.
# Zero-padded batch rows contribute nothing to the sums.
# ---------------------------------------------------------------------------
def _bn_stats_kernel(x_ref, v_ref, sx_ref, qx_ref, sv_ref, qv_ref):
    @pl.when(pl.program_id(0) == 0)
    def _():
        sx_ref[...] = jnp.zeros_like(sx_ref)
        qx_ref[...] = jnp.zeros_like(qx_ref)
        sv_ref[...] = jnp.zeros_like(sv_ref)
        qv_ref[...] = jnp.zeros_like(qv_ref)

    x = x_ref[...]
    v = v_ref[...]
    sx_ref[...] += jnp.sum(x, axis=0, keepdims=True)
    qx_ref[...] += jnp.sum(x * x, axis=0, keepdims=True)
    sv_ref[...] += jnp.sum(v, axis=0, keepdims=True)
    qv_ref[...] += jnp.sum(v * v, axis=0, keepdims=True)


# ---------------------------------------------------------------------------
# Kernel 2: fused (BN-folded) linear for both branches:
#   out_tile = x_tile @ Ws_folded_tile + view_tile @ Wu_folded_tile + b_tile
# Two MXU dots accumulating into one f32 tile, lane-dense output store.
# ---------------------------------------------------------------------------
def _fused_linear_kernel(x_ref, v_ref, ws_ref, wu_ref, b_ref, o_ref):
    acc = jnp.dot(x_ref[...], ws_ref[...], preferred_element_type=jnp.float32)
    acc = acc + jnp.dot(v_ref[...], wu_ref[...],
                        preferred_element_type=jnp.float32)
    o_ref[...] = (acc + b_ref[...]).astype(o_ref.dtype)


def block_forward(x, view, params, *, mxu_dtype=jnp.bfloat16):
    """x: [N, out_features], view: [N, nfea] -> [N, out_features] (f32)."""
    N, F = x.shape
    _, K = view.shape

    # ---- batch tiling (pad N so the tile divides it; zero rows are harmless)
    TN = min(256, _round_up(N, 8))
    N_pad = _round_up(N, TN)
    if N_pad != N:
        x_p = jnp.pad(x, ((0, N_pad - N), (0, 0)))
        v_p = jnp.pad(view, ((0, N_pad - N), (0, 0)))
    else:
        x_p, v_p = x, view

    x_f32 = x_p.astype(jnp.float32)
    v_f32 = v_p.astype(jnp.float32)

    # ---- Pallas pass 1: batch statistics (f32) -------------------------------
    sum_x, ssq_x, sum_v, ssq_v = pl.pallas_call(
        _bn_stats_kernel,
        out_shape=(jax.ShapeDtypeStruct((1, F), jnp.float32),
                   jax.ShapeDtypeStruct((1, F), jnp.float32),
                   jax.ShapeDtypeStruct((1, K), jnp.float32),
                   jax.ShapeDtypeStruct((1, K), jnp.float32)),
        grid=(N_pad // TN,),
        in_specs=[pl.BlockSpec((TN, F), lambda i: (i, 0)),
                  pl.BlockSpec((TN, K), lambda i: (i, 0))],
        out_specs=(pl.BlockSpec((1, F), lambda i: (0, 0)),
                   pl.BlockSpec((1, F), lambda i: (0, 0)),
                   pl.BlockSpec((1, K), lambda i: (0, 0)),
                   pl.BlockSpec((1, K), lambda i: (0, 0))),
        compiler_params=pltpu.CompilerParams(
            dimension_semantics=("arbitrary",),
            vmem_limit_bytes=32 * 1024 * 1024),
    )(x_f32, v_f32)

    # ---- Fold BN into the linear weights / bias (tiny O((F+K)*F) f32 work) ---
    n = jnp.float32(N)
    mean_x = sum_x[0] / n
    var_x = ssq_x[0] / n - mean_x * mean_x
    mean_v = sum_v[0] / n
    var_v = ssq_v[0] / n - mean_v * mean_v

    scale_x = params["S_gamma"] * jax.lax.rsqrt(var_x + BN_EPS)      # [F]
    shift_x = params["S_beta"] - mean_x * scale_x                    # [F]
    scale_v = params["U_gamma"] * jax.lax.rsqrt(var_v + BN_EPS)      # [K]
    shift_v = params["U_beta"] - mean_v * scale_v                    # [K]

    w_s = (params["S_w"] * scale_x[None, :]).T                       # [F, F]
    w_u = (params["U_w"] * scale_v[None, :]).T                       # [K, F]
    b_cat = (shift_x @ params["S_w"].T + shift_v @ params["U_w"].T
             + params["S_b"] + params["U_b"])                        # [F]

    # ---- Lane-dense output padding (multiple of 128) --------------------------
    Fp = _round_up(F, 128)
    if Fp != F:
        w_s = jnp.pad(w_s, ((0, 0), (0, Fp - F)))
        w_u = jnp.pad(w_u, ((0, 0), (0, Fp - F)))
        b_cat = jnp.pad(b_cat, (0, Fp - F))
    b_cat = b_cat.reshape(1, Fp).astype(jnp.float32)

    xm = x_p.astype(mxu_dtype)
    vm = v_p.astype(mxu_dtype)
    w_s = w_s.astype(mxu_dtype)
    w_u = w_u.astype(mxu_dtype)

    TF = 512 if Fp % 512 == 0 else (256 if Fp % 256 == 0 else 128)
    TF = min(TF, Fp)

    # ---- Pallas pass 2: fused tiled matmul ------------------------------------
    out = pl.pallas_call(
        _fused_linear_kernel,
        out_shape=jax.ShapeDtypeStruct((N_pad, Fp), jnp.float32),
        grid=(N_pad // TN, Fp // TF),
        in_specs=[pl.BlockSpec((TN, F), lambda i, j: (i, 0)),
                  pl.BlockSpec((TN, K), lambda i, j: (i, 0)),
                  pl.BlockSpec((F, TF), lambda i, j: (0, j)),
                  pl.BlockSpec((K, TF), lambda i, j: (0, j)),
                  pl.BlockSpec((1, TF), lambda i, j: (0, j))],
        out_specs=pl.BlockSpec((TN, TF), lambda i, j: (i, j)),
        compiler_params=pltpu.CompilerParams(
            dimension_semantics=("parallel", "parallel"),
            vmem_limit_bytes=32 * 1024 * 1024),
    )(xm, vm, w_s, w_u, b_cat)

    return out[:N, :F]


def init_params(key, out_features, nfea):
    """Deterministic synthetic parameters (PyTorch-style init shapes)."""
    k1, k2, k3, k4 = jax.random.split(key, 4)
    bound_s = 1.0 / jnp.sqrt(out_features)
    bound_u = 1.0 / jnp.sqrt(nfea)
    return {
        "S_w": jax.random.uniform(k1, (out_features, out_features),
                                  jnp.float32, -bound_s, bound_s),
        "S_b": jax.random.uniform(k2, (out_features,),
                                  jnp.float32, -bound_s, bound_s),
        "U_w": jax.random.uniform(k3, (out_features, nfea),
                                  jnp.float32, -bound_u, bound_u),
        "U_b": jax.random.uniform(k4, (out_features,),
                                  jnp.float32, -bound_u, bound_u),
        "S_gamma": jnp.ones((out_features,), jnp.float32),
        "S_beta": jnp.zeros((out_features,), jnp.float32),
        "U_gamma": jnp.ones((nfea,), jnp.float32),
        "U_beta": jnp.zeros((nfea,), jnp.float32),
    }


def _reference(x, view, params):
    """Pure-JAX reference mirroring the PyTorch forward (training-mode BN)."""
    def bn(a, g, b):
        m = jnp.mean(a, axis=0, keepdims=True)
        v = jnp.mean((a - m) ** 2, axis=0, keepdims=True)
        return (a - m) / jnp.sqrt(v + BN_EPS) * g + b

    i1 = bn(x, params["S_gamma"], params["S_beta"]) @ params["S_w"].T + params["S_b"]
    i2 = bn(view, params["U_gamma"], params["U_beta"]) @ params["U_w"].T + params["U_b"]
    return i1 + i2


if __name__ == "__main__":
    out_features, nfea, batch = 32, 16, 8

    key = jax.random.PRNGKey(0)
    kx, kv, kp = jax.random.split(key, 3)
    x = jax.random.normal(kx, (batch, out_features), jnp.float32)
    view = jax.random.normal(kv, (batch, nfea), jnp.float32)
    params = init_params(kp, out_features, nfea)

    ref = _reference(x, view, params)

    fwd = jax.jit(block_forward, static_argnames=("mxu_dtype",))

    # f32-operand MXU path: check against the PyTorch-equivalent reference.
    out_f32 = jax.block_until_ready(fwd(x, view, params, mxu_dtype=jnp.float32))
    assert out_f32.shape == (batch, out_features)
    assert jnp.allclose(out_f32, ref, atol=1e-2, rtol=1e-2), "f32 mismatch vs reference"

    # bf16-operand MXU path (v6e/v7x throughput): looser tolerance for rounding.
    out_bf16 = jax.block_until_ready(fwd(x, view, params, mxu_dtype=jnp.bfloat16))
    assert out_bf16.shape == (batch, out_features)
    assert jnp.allclose(out_bf16, ref, atol=1e-1, rtol=1e-1), "bf16 mismatch vs reference"

    print("KERNEL_OK")
</pallas_src>

<mosaic_0001>
module attributes {stable_mosaic.version = 11 : i64} {
  func.func @_bn_stats_kernel(%arg0: i32, %arg1: memref<8x32xf32, #tpu.memory_space<vmem>>, %arg2: memref<8x16xf32, #tpu.memory_space<vmem>>, %arg3: memref<1x32xf32, #tpu.memory_space<vmem>>, %arg4: memref<1x32xf32, #tpu.memory_space<vmem>>, %arg5: memref<1x16xf32, #tpu.memory_space<vmem>>, %arg6: memref<1x16xf32, #tpu.memory_space<vmem>>) attributes {dimension_semantics = [#tpu.dimension_semantics<arbitrary>], iteration_bounds = array<i64: 1>, scalar_prefetch = 0 : i64, scratch_operands = 0 : i64, tpu.core_type = #tpu.core_type<tc>, window_params = [{transform_indices = @transform_0, window_bounds = array<i64: 8, 32>}, {transform_indices = @transform_1, window_bounds = array<i64: 8, 16>}, {pipeline_mode = #tpu.pipeline_mode<synchronous>, transform_indices = @transform_2, window_bounds = array<i64: 1, 32>}, {pipeline_mode = #tpu.pipeline_mode<synchronous>, transform_indices = @transform_3, window_bounds = array<i64: 1, 32>}, {pipeline_mode = #tpu.pipeline_mode<synchronous>, transform_indices = @transform_4, window_bounds = array<i64: 1, 16>}, {pipeline_mode = #tpu.pipeline_mode<synchronous>, transform_indices = @transform_5, window_bounds = array<i64: 1, 16>}]} {
    %c0_i32 = arith.constant 0 : i32
    %0 = arith.cmpi eq, %arg0, %c0_i32 : i32
    %1 = arith.extui %0 : i1 to i32
    %c0_i32_0 = arith.constant 0 : i32
    %2 = arith.cmpi ne, %1, %c0_i32_0 : i32
    scf.if %2 {
      %cst_23 = arith.constant 0.000000e+00 : f32
      %27 = vector.broadcast %cst_23 : f32 to vector<1x32xf32>
      %c0_24 = arith.constant 0 : index
      %c0_25 = arith.constant 0 : index
      %28 = vector.load %arg3[%c0_24, %c0_25] : memref<1x32xf32, #tpu.memory_space<vmem>>, vector<1x32xf32>
      tpu.vector_store %arg3[%c0_24, %c0_25], %27 {strides = array<i32>} : memref<1x32xf32, #tpu.memory_space<vmem>>, vector<1x32xf32>,
      %cst_26 = arith.constant 0.000000e+00 : f32
      %29 = vector.broadcast %cst_26 : f32 to vector<1x32xf32>
      %c0_27 = arith.constant 0 : index
      %c0_28 = arith.constant 0 : index
      %30 = vector.load %arg4[%c0_27, %c0_28] : memref<1x32xf32, #tpu.memory_space<vmem>>, vector<1x32xf32>
      tpu.vector_store %arg4[%c0_27, %c0_28], %29 {strides = array<i32>} : memref<1x32xf32, #tpu.memory_space<vmem>>, vector<1x32xf32>,
      %cst_29 = arith.constant 0.000000e+00 : f32
      %31 = vector.broadcast %cst_29 : f32 to vector<1x16xf32>
      %c0_30 = arith.constant 0 : index
      %c0_31 = arith.constant 0 : index
      %32 = vector.load %arg5[%c0_30, %c0_31] : memref<1x16xf32, #tpu.memory_space<vmem>>, vector<1x16xf32>
      tpu.vector_store %arg5[%c0_30, %c0_31], %31 {strides = array<i32>} : memref<1x16xf32, #tpu.memory_space<vmem>>, vector<1x16xf32>,
      %cst_32 = arith.constant 0.000000e+00 : f32
      %33 = vector.broadcast %cst_32 : f32 to vector<1x16xf32>
      %c0_33 = arith.constant 0 : index
      %c0_34 = arith.constant 0 : index
      %34 = vector.load %arg6[%c0_33, %c0_34] : memref<1x16xf32, #tpu.memory_space<vmem>>, vector<1x16xf32>
      tpu.vector_store %arg6[%c0_33, %c0_34], %33 {strides = array<i32>} : memref<1x16xf32, #tpu.memory_space<vmem>>, vector<1x16xf32>,
    } else {
    }
    %c0 = arith.constant 0 : index
    %c0_1 = arith.constant 0 : index
    %3 = vector.load %arg1[%c0, %c0_1] : memref<8x32xf32, #tpu.memory_space<vmem>>, vector<8x32xf32>
    %c0_2 = arith.constant 0 : index
    %c0_3 = arith.constant 0 : index
    %4 = vector.load %arg2[%c0_2, %c0_3] : memref<8x16xf32, #tpu.memory_space<vmem>>, vector<8x16xf32>
    %c0_4 = arith.constant 0 : index
    %c0_5 = arith.constant 0 : index
    %5 = vector.load %arg3[%c0_4, %c0_5] : memref<1x32xf32, #tpu.memory_space<vmem>>, vector<1x32xf32>
    %cst = arith.constant dense<0.000000e+00> : vector<32xf32>
    %6 = vector.multi_reduction <add>, %3, %cst [0] : vector<8x32xf32> to vector<32xf32>
    %7 = vector.shape_cast %6 : vector<32xf32> to vector<1x32xf32>
    %8 = arith.addf %5, %7 : vector<1x32xf32>
    %c0_6 = arith.constant 0 : index
    %c0_7 = arith.constant 0 : index
    %9 = vector.load %arg3[%c0_6, %c0_7] : memref<1x32xf32, #tpu.memory_space<vmem>>, vector<1x32xf32>
    tpu.vector_store %arg3[%c0_6, %c0_7], %8 {strides = array<i32>} : memref<1x32xf32, #tpu.memory_space<vmem>>, vector<1x32xf32>,
    %c0_8 = arith.constant 0 : index
    %c0_9 = arith.constant 0 : index
    %10 = vector.load %arg4[%c0_8, %c0_9] : memref<1x32xf32, #tpu.memory_space<vmem>>, vector<1x32xf32>
    %11 = arith.mulf %3, %3 : vector<8x32xf32>
    %cst_10 = arith.constant dense<0.000000e+00> : vector<32xf32>
    %12 = vector.multi_reduction <add>, %11, %cst_10 [0] : vector<8x32xf32> to vector<32xf32>
    %13 = vector.shape_cast %12 : vector<32xf32> to vector<1x32xf32>
    %14 = arith.addf %10, %13 : vector<1x32xf32>
    %c0_11 = arith.constant 0 : index
    %c0_12 = arith.constant 0 : index
    %15 = vector.load %arg4[%c0_11, %c0_12] : memref<1x32xf32, #tpu.memory_space<vmem>>, vector<1x32xf32>
    tpu.vector_store %arg4[%c0_11, %c0_12], %14 {strides = array<i32>} : memref<1x32xf32, #tpu.memory_space<vmem>>, vector<1x32xf32>,
    %c0_13 = arith.constant 0 : index
    %c0_14 = arith.constant 0 : index
    %16 = vector.load %arg5[%c0_13, %c0_14] : memref<1x16xf32, #tpu.memory_space<vmem>>, vector<1x16xf32>
    %cst_15 = arith.constant dense<0.000000e+00> : vector<16xf32>
    %17 = vector.multi_reduction <add>, %4, %cst_15 [0] : vector<8x16xf32> to vector<16xf32>
    %18 = vector.shape_cast %17 : vector<16xf32> to vector<1x16xf32>
    %19 = arith.addf %16, %18 : vector<1x16xf32>
    %c0_16 = arith.constant 0 : index
    %c0_17 = arith.constant 0 : index
    %20 = vector.load %arg5[%c0_16, %c0_17] : memref<1x16xf32, #tpu.memory_space<vmem>>, vector<1x16xf32>
    tpu.vector_store %arg5[%c0_16, %c0_17], %19 {strides = array<i32>} : memref<1x16xf32, #tpu.memory_space<vmem>>, vector<1x16xf32>,
    %c0_18 = arith.constant 0 : index
    %c0_19 = arith.constant 0 : index
    %21 = vector.load %arg6[%c0_18, %c0_19] : memref<1x16xf32, #tpu.memory_space<vmem>>, vector<1x16xf32>
    %22 = arith.mulf %4, %4 : vector<8x16xf32>
    %cst_20 = arith.constant dense<0.000000e+00> : vector<16xf32>
    %23 = vector.multi_reduction <add>, %22, %cst_20 [0] : vector<8x16xf32> to vector<16xf32>
    %24 = vector.shape_cast %23 : vector<16xf32> to vector<1x16xf32>
    %25 = arith.addf %21, %24 : vector<1x16xf32>
    %c0_21 = arith.constant 0 : index
    %c0_22 = arith.constant 0 : index
    %26 = vector.load %arg6[%c0_21, %c0_22] : memref<1x16xf32, #tpu.memory_space<vmem>>, vector<1x16xf32>
    tpu.vector_store %arg6[%c0_21, %c0_22], %25 {strides = array<i32>} : memref<1x16xf32, #tpu.memory_space<vmem>>, vector<1x16xf32>,
    return
  }
  func.func @transform_0(%arg0: i32) -> (i32, i32) {
    %c0_i32 = arith.constant 0 : i32
    %c0_i32_0 = arith.constant 0 : i32
    return %arg0, %c0_i32 : i32, i32
  }
  func.func @transform_1(%arg0: i32) -> (i32, i32) {
    %c0_i32 = arith.constant 0 : i32
    %c0_i32_0 = arith.constant 0 : i32
    return %arg0, %c0_i32 : i32, i32
  }
  func.func @transform_2(%arg0: i32) -> (i32, i32) {
    %c0_i32 = arith.constant 0 : i32
    %c0_i32_0 = arith.constant 0 : i32
    %c0_i32_1 = arith.constant 0 : i32
    return %c0_i32, %c0_i32_0 : i32, i32
  }
  func.func @transform_3(%arg0: i32) -> (i32, i32) {
    %c0_i32 = arith.constant 0 : i32
    %c0_i32_0 = arith.constant 0 : i32
    %c0_i32_1 = arith.constant 0 : i32
    return %c0_i32, %c0_i32_0 : i32, i32
  }
  func.func @transform_4(%arg0: i32) -> (i32, i32) {
    %c0_i32 = arith.constant 0 : i32
    %c0_i32_0 = arith.constant 0 : i32
    %c0_i32_1 = arith.constant 0 : i32
    return %c0_i32, %c0_i32_0 : i32, i32
  }
  func.func @transform_5(%arg0: i32) -> (i32, i32) {
    %c0_i32 = arith.constant 0 : i32
    %c0_i32_0 = arith.constant 0 : i32
    %c0_i32_1 = arith.constant 0 : i32
    return %c0_i32, %c0_i32_0 : i32, i32
  }
}

module attributes {stable_mosaic.version = 11 : i64} {
  func.func @_fused_linear_kernel(%arg0: i32, %arg1: i32, %arg2: memref<8x32xf32, #tpu.memory_space<vmem>>, %arg3: memref<8x16xf32, #tpu.memory_space<vmem>>, %arg4: memref<32x128xf32, #tpu.memory_space<vmem>>, %arg5: memref<16x128xf32, #tpu.memory_space<vmem>>, %arg6: memref<1x128xf32, #tpu.memory_space<vmem>>, %arg7: memref<8x128xf32, #tpu.memory_space<vmem>>) attributes {dimension_semantics = [#tpu.dimension_semantics<parallel>, #tpu.dimension_semantics<parallel>], iteration_bounds = array<i64: 1, 1>, scalar_prefetch = 0 : i64, scratch_operands = 0 : i64, tpu.core_type = #tpu.core_type<tc>, window_params = [{transform_indices = @transform_0, window_bounds = array<i64: 8, 32>}, {transform_indices = @transform_1, window_bounds = array<i64: 8, 16>}, {transform_indices = @transform_2, window_bounds = array<i64: 32, 128>}, {transform_indices = @transform_3, window_bounds = array<i64: 16, 128>}, {transform_indices = @transform_4, window_bounds = array<i64: 1, 128>}, {transform_indices = @transform_5, window_bounds = array<i64: 8, 128>}]} {
    %c0 = arith.constant 0 : index
    %c0_0 = arith.constant 0 : index
    %0 = vector.load %arg2[%c0, %c0_0] : memref<8x32xf32, #tpu.memory_space<vmem>>, vector<8x32xf32>
    %c0_1 = arith.constant 0 : index
    %c0_2 = arith.constant 0 : index
    %1 = vector.load %arg4[%c0_1, %c0_2] : memref<32x128xf32, #tpu.memory_space<vmem>>, vector<32x128xf32>
    %cst = arith.constant dense<0.000000e+00> : vector<8x128xf32>
    %2 = tpu.matmul %0, %1, %cst {dimension_numbers = #tpu.dot_dimension_numbers<[1], [0], [0], [1], [0, 0, 1, 1], [], []>} : vector<8x32xf32>, vector<32x128xf32>, vector<8x128xf32> -> vector<8x128xf32>
    %c0_3 = arith.constant 0 : index
    %c0_4 = arith.constant 0 : index
    %3 = vector.load %arg3[%c0_3, %c0_4] : memref<8x16xf32, #tpu.memory_space<vmem>>, vector<8x16xf32>
    %c0_5 = arith.constant 0 : index
    %c0_6 = arith.constant 0 : index
    %4 = vector.load %arg5[%c0_5, %c0_6] : memref<16x128xf32, #tpu.memory_space<vmem>>, vector<16x128xf32>
    %cst_7 = arith.constant dense<0.000000e+00> : vector<8x128xf32>
    %5 = tpu.matmul %3, %4, %cst_7 {dimension_numbers = #tpu.dot_dimension_numbers<[1], [0], [0], [1], [0, 0, 1, 1], [], []>} : vector<8x16xf32>, vector<16x128xf32>, vector<8x128xf32> -> vector<8x128xf32>
    %6 = arith.addf %2, %5 : vector<8x128xf32>
    %c0_8 = arith.constant 0 : index
    %c0_9 = arith.constant 0 : index
    %7 = vector.load %arg6[%c0_8, %c0_9] : memref<1x128xf32, #tpu.memory_space<vmem>>, vector<1x128xf32>
    %8 = vector.broadcast %7 : vector<1x128xf32> to vector<8x128xf32>
    %9 = arith.addf %6, %8 : vector<8x128xf32>
    %c0_10 = arith.constant 0 : index
    %c0_11 = arith.constant 0 : index
    %10 = vector.load %arg7[%c0_10, %c0_11] : memref<8x128xf32, #tpu.memory_space<vmem>>, vector<8x128xf32>
    tpu.vector_store %arg7[%c0_10, %c0_11], %9 {strides = array<i32>} : memref<8x128xf32, #tpu.memory_space<vmem>>, vector<8x128xf32>,
    return
  }
  func.func @transform_0(%arg0: i32, %arg1: i32) -> (i32, i32) {
    %c0_i32 = arith.constant 0 : i32
    %c0_i32_0 = arith.constant 0 : i32
    return %arg0, %c0_i32 : i32, i32
  }
  func.func @transform_1(%arg0: i32, %arg1: i32) -> (i32, i32) {
    %c0_i32 = arith.constant 0 : i32
    %c0_i32_0 = arith.constant 0 : i32
    return %arg0, %c0_i32 : i32, i32
  }
  func.func @transform_2(%arg0: i32, %arg1: i32) -> (i32, i32) {
    %c0_i32 = arith.constant 0 : i32
    %c0_i32_0 = arith.constant 0 : i32
    return %c0_i32, %arg1 : i32, i32
  }
  func.func @transform_3(%arg0: i32, %arg1: i32) -> (i32, i32) {
    %c0_i32 = arith.constant 0 : i32
    %c0_i32_0 = arith.constant 0 : i32
    return %c0_i32, %arg1 : i32, i32
  }
  func.func @transform_4(%arg0: i32, %arg1: i32) -> (i32, i32) {
    %c0_i32 = arith.constant 0 : i32
    %c0_i32_0 = arith.constant 0 : i32
    return %c0_i32, %arg1 : i32, i32
  }
  func.func @transform_5(%arg0: i32, %arg1: i32) -> (i32, i32) {
    %c0_i32 = arith.constant 0 : i32
    return %arg0, %arg1 : i32, i32
  }
}

</mosaic_0001>

<llo_original>
// kernel: block_forward.2
$region0: #{block_forward.2}
  #allocation0 [shape = 'u32[]', space=smem, size = 0x4, offset = 0x4, fixed_abs, tag = 'smem constant byte address 0x4 - core index']
  #allocation1 [shape = 'u32[144,128]{1,0:T(1,128)}', space=vmem, size = 0x12000, scoped, tag = 'internal scratch']
  %s0 = inlined_call_operand.vmem [shape: f32[8,32], index: 0, kind: input, shape index: {}]
  %s1 = inlined_call_operand.vmem [shape: f32[8,16], index: 1, kind: input, shape index: {}]
  %s2 = inlined_call_operand.vmem [shape: f32[1,32], index: 2, kind: output, shape index: {0}]
  %s3 = inlined_call_operand.vmem [shape: f32[1,32], index: 3, kind: output, shape index: {1}]
  %s4 = inlined_call_operand.vmem [shape: f32[1,16], index: 4, kind: output, shape index: {2}]
  %s5 = inlined_call_operand.vmem [shape: f32[1,16], index: 5, kind: output, shape index: {3}]
  %6 = xla_tuple %s2, %s3, %s4, %s5
  %s7 = sld [smem:[#allocation0]]
  $region46: #{block_forward.2} parent=0
    _
  %s9 = ssub.s32 1, %s7
  %s10 = scalar_select 0, %s9, %s7
  // Predicated region
  $region2: #{block_forward.2} parent=0 // pred_check
    _
  $region3: #{block_forward.2} parent=0 // pred_check_branch
    %12 = sbr.rel (0) target = $region5
  $region4: #{block_forward.2} parent=0 // pred_region
    _
  $region5: #{block_forward.2} parent=0 // pred_fallthru
    _
  // Predicated region
  $region6: #{block_forward.2} parent=0 // pred_check
    _
  $region7: #{block_forward.2} parent=0 // pred_check_branch
    %14 = sbr.rel (0) target = $region9
  $region8: #{block_forward.2} parent=0 // pred_region
    _
  $region9: #{block_forward.2} parent=0 // pred_fallthru
    _
  %p15 = scmp.eq.s32.totalorder 0, 0
  // Predicated region
  $region10: #{block_forward.2} parent=0 // pred_check
    %p16 = pneg %p15
  $region11: #{block_forward.2} parent=0 // pred_check_branch
    %18 = sbr.rel (%p16) target = $region13
  $region12: #{block_forward.2} parent=0 // pred_region
    %vm19 = vcmask 253952
    %20 = vst.msk [vmem:[%s2] sm:$0x1] %vm19, 0.0
    %21 = vst.msk [vmem:[%s3] sm:$0x1] %vm19, 0.0
    %vm22 = vcmask 122880
    %23 = vst.msk [vmem:[%s4] sm:$0x1] %vm22, 0.0
    %24 = vst.msk [vmem:[%s5] sm:$0x1] %vm22, 0.0
  $region13: #{block_forward.2} parent=0 // pred_fallthru
    _
  %v25 = vld [vmem:[%s0] sm:$0xff]
  %v26 = vld [vmem:[%s1] sm:$0xff]
  %v27 = vld [vmem:[%s2] sm:$0x1]
  %vm28 = vcmask 261120
  %v29 = vsel %vm28, %v25, 0.0
  %v30 = vrot.slane %v29, 4
  %v31 = vadd.f32 %v29, %v30
  %v32 = vrot.slane %v31, 2
  %v33 = vadd.f32 %v31, %v32
  %v34 = vrot.slane %v33, 1
  %v35 = vadd.f32 %v33, %v34
  %v36 = vadd.f32 %v27, %v35
  %vm37 = vcmask 253952
  %38 = vst.msk [vmem:[%s2] sm:$0x1] %vm37, %v36
  %v39 = vld [vmem:[%s3] sm:$0x1]
  %v40 = vmul.f32 %v25, %v25
  %v41 = vsel %vm28, %v40, 0.0
  %v42 = vrot.slane %v41, 4
  %v43 = vadd.f32 %v41, %v42
  %v44 = vrot.slane %v43, 2
  %v45 = vadd.f32 %v43, %v44
  %v46 = vrot.slane %v45, 1
  %v47 = vadd.f32 %v45, %v46
  %v48 = vadd.f32 %v39, %v47
  %49 = vst.msk [vmem:[%s3] sm:$0x1] %vm37, %v48
  %v50 = vld [vmem:[%s4] sm:$0x1]
  %vm51 = vcmask 130048
  %v52 = vsel %vm51, %v26, 0.0
  %v53 = vrot.slane %v52, 4
  %v54 = vadd.f32 %v52, %v53
  %v55 = vrot.slane %v54, 2
  %v56 = vadd.f32 %v54, %v55
  %v57 = vrot.slane %v56, 1
  %v58 = vadd.f32 %v56, %v57
  %v59 = vadd.f32 %v50, %v58
  %vm60 = vcmask 122880
  %61 = vst.msk [vmem:[%s4] sm:$0x1] %vm60, %v59
  %v62 = vld [vmem:[%s5] sm:$0x1]
  %v63 = vmul.f32 %v26, %v26
  %v64 = vsel %vm51, %v63, 0.0
  %v65 = vrot.slane %v64, 4
  %v66 = vadd.f32 %v64, %v65
  %v67 = vrot.slane %v66, 2
  %v68 = vadd.f32 %v66, %v67
  %v69 = vrot.slane %v68, 1
  %v70 = vadd.f32 %v68, %v69
  %v71 = vadd.f32 %v62, %v70
  %72 = vst.msk [vmem:[%s5] sm:$0x1] %vm60, %v71
  // Predicated region
  $region14: #{block_forward.2} parent=0 // pred_check
    _
  $region15: #{block_forward.2} parent=0 // pred_check_branch
    %74 = sbr.rel (0) target = $region17
  $region16: #{block_forward.2} parent=0 // pred_region
    _
  $region17: #{block_forward.2} parent=0 // pred_fallthru
    _
  // Predicated region
  $region18: #{block_forward.2} parent=0 // pred_check
    _
  $region19: #{block_forward.2} parent=0 // pred_check_branch
    %76 = sbr.rel (0) target = $region21
  $region20: #{block_forward.2} parent=0 // pred_region
    _
  $region21: #{block_forward.2} parent=0 // pred_fallthru
    _
  // Predicated region
  $region22: #{block_forward.2} parent=0 // pred_check
    _
  $region23: #{block_forward.2} parent=0 // pred_check_branch
    %78 = sbr.rel (0) target = $region25
  $region24: #{block_forward.2} parent=0 // pred_region
    _
  $region25: #{block_forward.2} parent=0 // pred_fallthru
    _
  // Predicated region
  $region26: #{block_forward.2} parent=0 // pred_check
    _
  $region27: #{block_forward.2} parent=0 // pred_check_branch
    %80 = sbr.rel (0) target = $region29
  $region28: #{block_forward.2} parent=0 // pred_region
    _
  $region29: #{block_forward.2} parent=0 // pred_fallthru
    _
  // Predicated region
  $region30: #{block_forward.2} parent=0 // pred_check
    _
  $region31: #{block_forward.2} parent=0 // pred_check_branch
    %82 = sbr.rel (0) target = $region33
  $region32: #{block_forward.2} parent=0 // pred_region
    _
  $region33: #{block_forward.2} parent=0 // pred_fallthru
    _
  // Predicated region
  $region34: #{block_forward.2} parent=0 // pred_check
    _
  $region35: #{block_forward.2} parent=0 // pred_check_branch
    %84 = sbr.rel (0) target = $region37
  $region36: #{block_forward.2} parent=0 // pred_region
    _
  $region37: #{block_forward.2} parent=0 // pred_fallthru
    _
  // Predicated region
  $region38: #{block_forward.2} parent=0 // pred_check
    _
  $region39: #{block_forward.2} parent=0 // pred_check_branch
    %86 = sbr.rel (0) target = $region41
  $region40: #{block_forward.2} parent=0 // pred_region
    _
  $region41: #{block_forward.2} parent=0 // pred_fallthru
    _
  // Predicated region
  $region42: #{block_forward.2} parent=0 // pred_check
    _
  $region43: #{block_forward.2} parent=0 // pred_check_branch
    %88 = sbr.rel (0) target = $region45
  $region44: #{block_forward.2} parent=0 // pred_region
    _
  $region45: #{block_forward.2} parent=0 // pred_fallthru
    _

// kernel: block_forward.3
$region0: #{block_forward.3}
  #allocation0 [shape = 'u32[]', space=smem, size = 0x4, offset = 0x4, fixed_abs, tag = 'smem constant byte address 0x4 - core index']
  #allocation1 [shape = 'u32[144,128]{1,0:T(1,128)}', space=vmem, size = 0x12000, scoped, tag = 'internal scratch']
  %s0 = inlined_call_operand.vmem [shape: f32[8,32], index: 0, kind: input, shape index: {}]
  %s1 = inlined_call_operand.vmem [shape: f32[8,16], index: 1, kind: input, shape index: {}]
  %s2 = inlined_call_operand.vmem [shape: f32[32,128], index: 2, kind: input, shape index: {}]
  %s3 = inlined_call_operand.vmem [shape: f32[16,128], index: 3, kind: input, shape index: {}]
  %s4 = inlined_call_operand.vmem [shape: f32[1,128], index: 4, kind: input, shape index: {}]
  %s5 = inlined_call_operand.hbm [shape: f32[8,128], index: 5, kind: output, shape index: {}]
  %s6 = sld [smem:[#allocation0]]
  $region30: #{block_forward.3} parent=0
    _
  %s8 = ssub.s32 1, %s6
  %s9 = scalar_select 0, %s8, %s6
  $region1: #{block_forward.3} parent=0
    #allocation2 [shape = 'u8[4096]{0}', space=vmem, size = 0x1000, scoped, tag = 'output window, operand 0, single buffered']
    #allocation3 [shape = 's32[1]{0}', space=sflag, size = 0x4, scoped, tag = 'scoped memory for block_forward.3']
    %10 = vsyncpa [#allocation3], 0
    // Predicated region
    $region2: #{block_forward.3} parent=1 // pred_check
      _
    $region3: #{block_forward.3} parent=1 // pred_check_branch
      %12 = sbr.rel (0) target = $region5
    $region4: #{block_forward.3} parent=1 // pred_region
      _
    $region5: #{block_forward.3} parent=1 // pred_fallthru
      _
    // Predicated region
    $region6: #{block_forward.3} parent=1 // pred_check
      _
    $region7: #{block_forward.3} parent=1 // pred_check_branch
      %14 = sbr.rel (0) target = $region9
    $region8: #{block_forward.3} parent=1 // pred_region
      _
    $region9: #{block_forward.3} parent=1 // pred_fallthru
      _
    // Predicated region
    $region10: #{block_forward.3} parent=1 // pred_check
      _
    $region11: #{block_forward.3} parent=1 // pred_check_branch
      %16 = sbr.rel (0) target = $region13
    $region12: #{block_forward.3} parent=1 // pred_region
      _
    $region13: #{block_forward.3} parent=1 // pred_fallthru
      _
    // Predicated region
    $region14: #{block_forward.3} parent=1 // pred_check
      _
    $region15: #{block_forward.3} parent=1 // pred_check_branch
      %18 = sbr.rel (0) target = $region17
    $region16: #{block_forward.3} parent=1 // pred_region
      _
    $region17: #{block_forward.3} parent=1 // pred_fallthru
      _
    // Predicated region
    $region18: #{block_forward.3} parent=1 // pred_check
      _
    $region19: #{block_forward.3} parent=1 // pred_check_branch
      %20 = sbr.rel (0) target = $region21
    $region20: #{block_forward.3} parent=1 // pred_region
      _
    $region21: #{block_forward.3} parent=1 // pred_fallthru
      _
    %v21 = vld [vmem:[%s0] sm:$0xff]
    %v22 = vld [vmem:[%s2] sm:$0xff]
    %v23 = vld [vmem:[%s2 + $0x8] sm:$0xff]
    %v24 = vld [vmem:[%s2 + $0x10] sm:$0xff]
    %v25 = vld [vmem:[%s2 + $0x18] sm:$0xff]
    %v26 = vld [vmem:[%s1] sm:$0xff]
    %v27 = vld [vmem:[%s3] sm:$0xff]
    %v28 = vld [vmem:[%s3 + $0x8] sm:$0xff]
    %vm29 = vcmask 130048
    %v31 = vsel %vm29, %v26, 0
    %33 = vmatprep.subr.mxu0 0.0
    %34 = vmatpush1.msra.mxu0 0.0
    %35 = vmatprep.subr.mxu0 0.0
    %36 = vmatpush1.msra.mxu0 0.0
    %37 = vmatprep.subr.mxu0 0.0
    %38 = vmatpush1.msra.mxu0 0.0
    %39 = vmatprep.subr.mxu0 0.0
    %40 = vmatpush1.msra.mxu0 0.0
    %41 = vmatprep.subr.mxu0 0.0
    %42 = vmatpush1.msra.mxu0 0.0
    %43 = vmatprep.subr.mxu0 0.0
    %44 = vmatpush1.msra.mxu0 0.0
    %45 = vmatprep.subr.mxu0 0.0
    %46 = vmatpush1.msra.mxu0 0.0
    %47 = vmatprep.subr.mxu0 0.0
    %48 = vmatpush1.msra.mxu0 0.0
    %49 = vmatprep.subr.mxu0 0.0
    %50 = vmatpush1.msra.mxu0 0.0
    %51 = vmatprep.subr.mxu0 0.0
    %52 = vmatpush1.msra.mxu0 0.0
    %53 = vmatprep.subr.mxu0 0.0
    %54 = vmatpush1.msra.mxu0 0.0
    %55 = vmatprep.subr.mxu0 0.0
    %56 = vmatpush1.msra.mxu0 0.0
    %57 = vmatprep.subr.mxu0 0.0
    %58 = vmatpush1.msra.mxu0 0.0
    %59 = vmatprep.subr.mxu0 0.0
    %60 = vmatpush1.msra.mxu0 0.0
    %61 = vmatprep.subr.mxu0 0.0
    %62 = vmatpush1.msra.mxu0 %v28
    %63 = vmatprep.subr.mxu0 0.0
    %64 = vmatpush1.msra.mxu0 %v27
    %65 = vmatprep.subr.mxu0 0.0
    %66 = vmatpush2.msra.mxu0 0.0
    %67 = vmatprep.subr.mxu0 0.0
    %68 = vmatpush2.msra.mxu0 0.0
    %69 = vmatprep.subr.mxu0 0.0
    %70 = vmatpush2.msra.mxu0 0.0
    %71 = vmatprep.subr.mxu0 0.0
    %72 = vmatpush2.msra.mxu0 0.0
    %73 = vmatprep.subr.mxu0 0.0
    %74 = vmatpush2.msra.mxu0 0.0
    %75 = vmatprep.subr.mxu0 0.0
    %76 = vmatpush2.msra.mxu0 0.0
    %77 = vmatprep.subr.mxu0 0.0
    %78 = vmatpush2.msra.mxu0 0.0
    %79 = vmatprep.subr.mxu0 0.0
    %80 = vmatpush2.msra.mxu0 0.0
    %81 = vmatprep.subr.mxu0 0.0
    %82 = vmatpush2.msra.mxu0 0.0
    %83 = vmatprep.subr.mxu0 0.0
    %84 = vmatpush2.msra.mxu0 0.0
    %85 = vmatprep.subr.mxu0 0.0
    %86 = vmatpush2.msra.mxu0 0.0
    %87 = vmatprep.subr.mxu0 0.0
    %88 = vmatpush2.msra.mxu0 0.0
    %89 = vmatprep.subr.mxu0 0.0
    %90 = vmatpush2.msra.mxu0 0.0
    %91 = vmatprep.subr.mxu0 0.0
    %92 = vmatpush2.msra.mxu0 0.0
    %93 = vmatprep.subr.mxu0 0.0
    %94 = vmatpush2.msra.mxu0 0.0
    %95 = vmatprep.subr.mxu0 0.0
    %96 = vmatpush2.msra.mxu0 0.0
    %97 = vmatprep.mubr.f32.mxu0 0.0
    %98 = vmatmul.mubr.f32.gmra.mxu0 %v31
    %v99 = vpop.f32.mrf.mxu0
    %v100 = vadd.f32 0.0, %v99
    %v101 = vpop.f32.mrf.mxu0
    %102 = vdwg.mxu0
    %vm103 = vcmask 261120
    %v105 = vsel %vm103, %v21, 0
    %107 = vmatprep.subr.mxu0 0.0
    %108 = vmatpush1.msra.mxu0 0.0
    %109 = vmatprep.subr.mxu0 0.0
    %110 = vmatpush1.msra.mxu0 0.0
    %111 = vmatprep.subr.mxu0 0.0
    %112 = vmatpush1.msra.mxu0 0.0
    %113 = vmatprep.subr.mxu0 0.0
    %114 = vmatpush1.msra.mxu0 0.0
    %115 = vmatprep.subr.mxu0 0.0
    %116 = vmatpush1.msra.mxu0 0.0
    %117 = vmatprep.subr.mxu0 0.0
    %118 = vmatpush1.msra.mxu0 0.0
    %119 = vmatprep.subr.mxu0 0.0
    %120 = vmatpush1.msra.mxu0 0.0
    %121 = vmatprep.subr.mxu0 0.0
    %122 = vmatpush1.msra.mxu0 0.0
    %123 = vmatprep.subr.mxu0 0.0
    %124 = vmatpush1.msra.mxu0 0.0
    %125 = vmatprep.subr.mxu0 0.0
    %126 = vmatpush1.msra.mxu0 0.0
    %127 = vmatprep.subr.mxu0 0.0
    %128 = vmatpush1.msra.mxu0 0.0
    %129 = vmatprep.subr.mxu0 0.0
    %130 = vmatpush1.msra.mxu0 0.0
    %131 = vmatprep.subr.mxu0 0.0
    %132 = vmatpush1.msra.mxu0 %v25
    %133 = vmatprep.subr.mxu0 0.0
    %134 = vmatpush1.msra.mxu0 %v24
    %135 = vmatprep.subr.mxu0 0.0
    %136 = vmatpush1.msra.mxu0 %v23
    %137 = vmatprep.subr.mxu0 0.0
    %138 = vmatpush1.msra.mxu0 %v22
    %139 = vmatprep.subr.mxu0 0.0
    %140 = vmatpush2.msra.mxu0 0.0
    %141 = vmatprep.subr.mxu0 0.0
    %142 = vmatpush2.msra.mxu0 0.0
    %143 = vmatprep.subr.mxu0 0.0
    %144 = vmatpush2.msra.mxu0 0.0
    %145 = vmatprep.subr.mxu0 0.0
    %146 = vmatpush2.msra.mxu0 0.0
    %147 = vmatprep.subr.mxu0 0.0
    %148 = vmatpush2.msra.mxu0 0.0
    %149 = vmatprep.subr.mxu0 0.0
    %150 = vmatpush2.msra.mxu0 0.0
    %151 = vmatprep.subr.mxu0 0.0
    %152 = vmatpush2.msra.mxu0 0.0
    %153 = vmatprep.subr.mxu0 0.0
    %154 = vmatpush2.msra.mxu0 0.0
    %155 = vmatprep.subr.mxu0 0.0
    %156 = vmatpush2.msra.mxu0 0.0
    %157 = vmatprep.subr.mxu0 0.0
    %158 = vmatpush2.msra.mxu0 0.0
    %159 = vmatprep.subr.mxu0 0.0
    %160 = vmatpush2.msra.mxu0 0.0
    %161 = vmatprep.subr.mxu0 0.0
    %162 = vmatpush2.msra.mxu0 0.0
    %163 = vmatprep.subr.mxu0 0.0
    %164 = vmatpush2.msra.mxu0 0.0
    %165 = vmatprep.subr.mxu0 0.0
    %166 = vmatpush2.msra.mxu0 0.0
    %167 = vmatprep.subr.mxu0 0.0
    %168 = vmatpush2.msra.mxu0 0.0
    %169 = vmatprep.subr.mxu0 0.0
    %170 = vmatpush2.msra.mxu0 0.0
    %171 = vmatprep.mubr.f32.mxu0 0.0
    %172 = vmatmul.mubr.f32.gmra.mxu0 %v105
    %v173 = vpop.f32.mrf.mxu0
    %v174 = vadd.f32 %v100, %v173
    %v175 = vpop.f32.mrf.mxu0
    %176 = vdwg.mxu0
    %v177 = vld [vmem:[%s4] sm:$0x1]
    %v179 = vlaneseq
    %v180 = vshrl.u32 %v179, 7
    %v181 = vsub.s32 0, %v180
    %v182 = vrot.slane %v177, %v181
    %v184 = vadd.f32 %v174, %v182
    %185 = vst [vmem:[#allocation2] sm:$0xff] %v184
    // Predicated region
    $region22: #{block_forward.3} parent=1 // pred_check
      _
    $region23: #{block_forward.3} parent=1 // pred_check_branch
      %187 = sbr.rel (0) target = $region25
    $region24: #{block_forward.3} parent=1 // pred_region
      %s189 = ssub.s32 128, 128
      %190 = vsyncadd [#allocation3], %s189
      %s192 = sshll.u32 [#allocation2], 4
      %s193 = int_to_ptr.vmem [resolvable:$true] %s192
      %195 = dma.vmem_to_hbm [thread:$0]  %s193, 128, %s5, [#allocation3]
    $region25: #{block_forward.3} parent=1 // pred_fallthru
      _
    // Predicated region
    $region26: #{block_forward.3} parent=1 // pred_check
      _
    $region27: #{block_forward.3} parent=1 // pred_check_branch
      %197 = sbr.rel (0) target = $region29
    $region28: #{block_forward.3} parent=1 // pred_region
      %198 = dma.done [#allocation3], 128
    $region29: #{block_forward.3} parent=1 // pred_fallthru
      _
    %199 = vsyncpa [#allocation3], 1

</llo_original>
